<compile_context>
chip_gen: v7x
topology: tpu7x:2x2x1
jax: 0.10.0
libtpu: 0.0.40
codegen_flags: <defaults>
</compile_context>

<pallas_src>
import math

import jax
import jax.numpy as jnp
from jax.experimental import pallas as pl
from jax.experimental.pallas import tpu as pltpu

# ---- synthetic "Config" ----------------------------------------------------
EMBEDDING_DIM = 16
NUM_FILTERS = 4
KERNEL_SIZE = 3
BN_EPS = 1e-5
D_OUT = EMBEDDING_DIM - KERNEL_SIZE + 1            # 14
REL_EMB_SIZE = NUM_FILTERS * D_OUT                 # 56
BN_SCALE = 1.0 / math.sqrt(1.0 + BN_EPS)           # eval-mode BatchNorm scale


# ---- conv-as-matrix (one-time parameter preprocessing, plain JAX) ----------
def conv_as_matrix(w, chan_scale):
    """Conv1d(1->F, K, bias=False) + per-channel BN scale as a (D, F*D_OUT) matrix.

    (x @ W)[n, f*D_OUT + t] == chan_scale[f] * sum_k w[f, k] * x[n, t + k],
    i.e. exactly `bn(conv(x.unsqueeze(1))).view(n, -1)` (channel-major flatten).
    """
    rows = jnp.arange(EMBEDDING_DIM)[:, None]       # input position d
    cols = jnp.arange(D_OUT)[None, :]               # output position t
    diff = rows - cols                              # tap index k = d - t
    mask = (diff >= 0) & (diff < KERNEL_SIZE)
    tap = jnp.clip(diff, 0, KERNEL_SIZE - 1)
    blocks = [jnp.where(mask, w[f][tap], 0.0) * chan_scale[f]
              for f in range(NUM_FILTERS)]
    return jnp.concatenate(blocks, axis=1).astype(jnp.float32)   # (D, F*D_OUT)


# ---- Pallas kernel: one bf16 MXU dot + sigmoid per entity tile -------------
def _score_kernel(ab_ref, e2t_ref, o_ref):
    s = jnp.dot(ab_ref[...], e2t_ref[...], preferred_element_type=jnp.float32)
    o_ref[...] = 1.0 / (1.0 + jnp.exp(-s))          # lane-dense (bsz, TILE_E) store


def complex_score(ab, e2t, *, tile_e):
    bsz, two_d = ab.shape
    td, e_pad = e2t.shape
    assert td == two_d and e_pad % tile_e == 0
    n_tiles = e_pad // tile_e
    cost = pl.CostEstimate(
        flops=2 * bsz * two_d * e_pad,
        transcendentals=bsz * e_pad,
        bytes_accessed=(two_d * e_pad * e2t.dtype.itemsize
                        + bsz * two_d * ab.dtype.itemsize
                        + bsz * e_pad * 4),
    )
    return pl.pallas_call(
        _score_kernel,
        out_shape=jax.ShapeDtypeStruct((bsz, e_pad), jnp.float32),
        grid_spec=pltpu.PrefetchScalarGridSpec(
            num_scalar_prefetch=0,
            grid=(n_tiles,),
            in_specs=[
                pl.BlockSpec((bsz, two_d), lambda i: (0, 0)),     # resident LHS
                pl.BlockSpec((two_d, tile_e), lambda i: (0, i)),  # streamed entity table
            ],
            out_specs=pl.BlockSpec((bsz, tile_e), lambda i: (0, i)),
        ),
        compiler_params=pltpu.CompilerParams(
            dimension_semantics=("parallel",),       # shard entity tiles across TCs
        ),
        cost_estimate=cost,
    )(ab, e2t)


# ---- tile selection --------------------------------------------------------
def _round_up(x, m):
    return -(-x // m) * m


def choose_tile_e(num_entities, *, max_tile=32768, min_steps=4):
    """Largest lane-aligned tile <= max_tile that still leaves >= min_steps
    grid steps (v7x megacore sharding + double-buffering); multiples of 128."""
    e_pad128 = _round_up(num_entities, 128)
    tile = max(128, _round_up(pl.cdiv(e_pad128, min_steps), 128))
    tile = min(tile, max_tile, e_pad128)
    e_pad = _round_up(num_entities, tile)
    return tile, e_pad


# ---- model parameters (deterministic, synthetic) ---------------------------
def init_params(key, num_entities, num_relations):
    ks = jax.random.split(key, 6)

    def emb(k, n, dim):
        w = jax.random.normal(k, (n, dim), jnp.float32) * 0.1
        return w.at[0].set(0.0)                      # padding_idx=0

    return {
        "emb_e_real": emb(ks[0], num_entities, EMBEDDING_DIM),
        "emb_e_img": emb(ks[1], num_entities, EMBEDDING_DIM),
        "emb_rel_real": emb(ks[2], num_relations, REL_EMB_SIZE),
        "emb_rel_img": emb(ks[3], num_relations, REL_EMB_SIZE),
        # Conv1d weight (out_ch=4, in_ch=1, k=3) with in_ch squeezed -> (4, 3)
        "w_real": jax.random.normal(ks[4], (NUM_FILTERS, KERNEL_SIZE), jnp.float32) * 0.5,
        "w_img": jax.random.normal(ks[5], (NUM_FILTERS, KERNEL_SIZE), jnp.float32) * 0.5,
    }


# ---- one-time scoring state: conv matrices + cached bf16 entity layout -----
def prepare_scoring_state(params, *, max_tile=32768):
    num_entities = params["emb_e_real"].shape[0]
    bn_chan = jnp.full((NUM_FILTERS,), BN_SCALE, jnp.float32)
    w_r = conv_as_matrix(params["w_real"], bn_chan)   # bn1 folded in, (D, 56)
    w_i = conv_as_matrix(params["w_img"], bn_chan)    # bn3 folded in, (D, 56)

    tile_e, e_pad = choose_tile_e(num_entities, max_tile=max_tile)
    # contraction-major raw entity table: rows [0:D) = real^T, [D:2D) = img^T
    e2t = jnp.concatenate([params["emb_e_real"].T,
                           params["emb_e_img"].T], axis=0)         # (2D, E)
    if e_pad != num_entities:
        e2t = jnp.pad(e2t, ((0, 0), (0, e_pad - num_entities)))
    return {
        "w_r": w_r,
        "w_i": w_i,
        "e2t": e2t.astype(jnp.bfloat16),              # streamed in bf16
        "tile_e": tile_e,
        "e_pad": e_pad,
        "num_entities": num_entities,
    }


# ---- forward: gathers + tiny hoisted LHS in JAX, scoring in one pallas_call
def forward(params, state, e1_idx, rel_idx):
    # embedding lookups (glue)
    e1r = params["emb_e_real"][e1_idx].astype(jnp.float32)          # (bsz, D)
    e1i = params["emb_e_img"][e1_idx].astype(jnp.float32)
    relr = params["emb_rel_real"][rel_idx].astype(jnp.float32) * BN_SCALE
    reli = params["emb_rel_img"][rel_idx].astype(jnp.float32) * BN_SCALE

    # grid-invariant e1-side work (O(bsz*56) flops, done once, not per tile):
    e1r_dec = (e1r * BN_SCALE) @ state["w_r"]                       # (bsz, 56)
    e1i_dec = (e1i * BN_SCALE) @ state["w_i"]
    # ComplEx regroup: 4 matmuls -> 2
    a = e1r_dec * relr - e1i_dec * reli
    b = e1r_dec * reli + e1i_dec * relr
    # fold the (linear) entity-side decompress onto the tiny LHS:
    #   a @ (E2r @ Wr)^T == (a @ Wr^T) @ E2r^T
    ab = jnp.concatenate([a @ state["w_r"].T, b @ state["w_i"].T], axis=1)  # (bsz, 2D)

    pred = complex_score(ab.astype(jnp.bfloat16), state["e2t"],
                         tile_e=state["tile_e"])
    return pred[:, :state["num_entities"]]                          # (bsz, E)


# ---- pure-JAX reference: follows the original module's computation ---------
def _ref_conv_flat(x, w, chan_scale, prescale):
    xp = x * prescale
    outs = []
    for f in range(NUM_FILTERS):
        acc = sum(w[f, k] * xp[:, k:k + D_OUT] for k in range(KERNEL_SIZE))
        outs.append(chan_scale[f] * acc)
    return jnp.concatenate(outs, axis=1)


def forward_ref(params, e1_idx, rel_idx):
    bn_chan = jnp.full((NUM_FILTERS,), BN_SCALE, jnp.float32)
    e1r = _ref_conv_flat(params["emb_e_real"][e1_idx], params["w_real"], bn_chan, BN_SCALE)
    e1i = _ref_conv_flat(params["emb_e_img"][e1_idx], params["w_img"], bn_chan, BN_SCALE)
    relr = params["emb_rel_real"][rel_idx] * BN_SCALE
    reli = params["emb_rel_img"][rel_idx] * BN_SCALE
    e2r = _ref_conv_flat(params["emb_e_real"], params["w_real"], bn_chan, 1.0)
    e2i = _ref_conv_flat(params["emb_e_img"], params["w_img"], bn_chan, 1.0)
    score = (e1r * relr) @ e2r.T + (e1r * reli) @ e2i.T \
        + (e1i * relr) @ e2i.T - (e1i * reli) @ e2r.T
    return jax.nn.sigmoid(score)


if __name__ == "__main__":
    num_entities, num_relations, bsz = 1000, 8, 2    # E not a tile multiple on purpose
    key = jax.random.PRNGKey(0)
    kp, ke, kr = jax.random.split(key, 3)
    params = init_params(kp, num_entities, num_relations)
    state = prepare_scoring_state(params)            # one-time cached layout / matrices
    e1_idx = jax.random.randint(ke, (bsz,), 0, num_entities)
    rel_idx = jax.random.randint(kr, (bsz,), 0, num_relations)

    pred = jax.block_until_ready(forward(params, state, e1_idx, rel_idx))

    ref = forward_ref(params, e1_idx, rel_idx)
    assert pred.shape == (bsz, num_entities)
    max_err = float(jnp.max(jnp.abs(pred - ref)))
    # bf16 entity stream + bf16 LHS with f32 accumulation -> loosened tolerance
    assert max_err < 3e-3, f"mismatch vs reference: max abs err {max_err}"
    print("KERNEL_OK")
</pallas_src>

<mosaic_0001>
module attributes {stable_mosaic.version = 11 : i64} {
  func.func @_score_kernel(%arg0: i32, %arg1: memref<2x32xbf16, #tpu.memory_space<vmem>>, %arg2: memref<32x256xbf16, #tpu.memory_space<vmem>>, %arg3: memref<2x256xf32, #tpu.memory_space<vmem>>) attributes {dimension_semantics = [#tpu.dimension_semantics<parallel>], iteration_bounds = array<i64: 4>, scalar_prefetch = 0 : i64, scratch_operands = 0 : i64, tpu.core_type = #tpu.core_type<tc>, window_params = [{pipeline_mode = #tpu.pipeline_mode<synchronous>, transform_indices = @transform_0, window_bounds = array<i64: 2, 32>}, {transform_indices = @transform_1, window_bounds = array<i64: 32, 256>}, {transform_indices = @transform_2, window_bounds = array<i64: 2, 256>}]} {
    %c0 = arith.constant 0 : index
    %c0_0 = arith.constant 0 : index
    %0 = vector.load %arg1[%c0, %c0_0] : memref<2x32xbf16, #tpu.memory_space<vmem>>, vector<2x32xbf16>
    %c0_1 = arith.constant 0 : index
    %c0_2 = arith.constant 0 : index
    %1 = vector.load %arg2[%c0_1, %c0_2] : memref<32x256xbf16, #tpu.memory_space<vmem>>, vector<32x256xbf16>
    %cst = arith.constant dense<0.000000e+00> : vector<2x256xf32>
    %2 = tpu.matmul %0, %1, %cst {dimension_numbers = #tpu.dot_dimension_numbers<[1], [0], [0], [1], [0, 0, 1, 1], [], []>} : vector<2x32xbf16>, vector<32x256xbf16>, vector<2x256xf32> -> vector<2x256xf32>
    %cst_3 = arith.constant 0.000000e+00 : f32
    %3 = vector.broadcast %cst_3 : f32 to vector<2x256xf32>
    %4 = arith.subf %3, %2 : vector<2x256xf32>
    %5 = math.exp %4 : vector<2x256xf32>
    %cst_4 = arith.constant 1.000000e+00 : f32
    %6 = vector.broadcast %cst_4 : f32 to vector<2x256xf32>
    %7 = arith.addf %6, %5 : vector<2x256xf32>
    %cst_5 = arith.constant 1.000000e+00 : f32
    %8 = vector.broadcast %cst_5 : f32 to vector<2x256xf32>
    %9 = arith.divf %8, %7 : vector<2x256xf32>
    %c0_6 = arith.constant 0 : index
    %c0_7 = arith.constant 0 : index
    %10 = vector.load %arg3[%c0_6, %c0_7] : memref<2x256xf32, #tpu.memory_space<vmem>>, vector<2x256xf32>
    tpu.vector_store %arg3[%c0_6, %c0_7], %9 {strides = array<i32>} : memref<2x256xf32, #tpu.memory_space<vmem>>, vector<2x256xf32>,
    return
  }
  func.func @transform_0(%arg0: i32) -> (i32, i32) {
    %c0_i32 = arith.constant 0 : i32
    %c0_i32_0 = arith.constant 0 : i32
    %c0_i32_1 = arith.constant 0 : i32
    return %c0_i32, %c0_i32_0 : i32, i32
  }
  func.func @transform_1(%arg0: i32) -> (i32, i32) {
    %c0_i32 = arith.constant 0 : i32
    %c0_i32_0 = arith.constant 0 : i32
    return %c0_i32, %arg0 : i32, i32
  }
  func.func @transform_2(%arg0: i32) -> (i32, i32) {
    %c0_i32 = arith.constant 0 : i32
    %c0_i32_0 = arith.constant 0 : i32
    return %c0_i32, %arg0 : i32, i32
  }
}

</mosaic_0001>

<llo_original>
// kernel: tpu_custom_call.1
$region0: #{tpu_custom_call.1}
  #allocation0 [shape = 'u32[]', space=smem, size = 0x4, offset = 0x4, fixed_abs, tag = 'smem constant byte address 0x4 - core index']
  #allocation1 [shape = 'u32[144,128]{1,0:T(1,128)}', space=vmem, size = 0x12000, scoped, tag = 'internal scratch']
  %s0 = inlined_call_operand.hbm [shape: bf16[2,32], index: 0, kind: input, shape index: {}]
  %s1 = inlined_call_operand.hbm [shape: bf16[32,1024], index: 1, kind: input, shape index: {}]
  %s2 = inlined_call_operand.hbm [shape: f32[2,1024], index: 2, kind: output, shape index: {}]
  %s3 = sld [smem:[#allocation0]]
  $region49: #{tpu_custom_call.1} parent=0
    _
  %s5 = ssub.s32 1, %s3
  %s6 = scalar_select 0, %s5, %s3
  $region1: #{tpu_custom_call.1} parent=0
    #allocation2 [shape = 'u8[512]{0}', space=vmem, size = 0x400, scoped, tag = 'input window, operand 0, single buffered']
    #allocation3 [shape = 's32[2]{0}', space=sflag, size = 0x8, scoped, tag = 'scoped memory for tpu_custom_call.1']
    #allocation4 [shape = 's32[2]{0}', space=sflag, size = 0x8, scoped, tag = 'scoped memory for tpu_custom_call.1']
    #allocation5 [shape = 'u8[32768]{0}', space=vmem, size = 0x8000, scoped, tag = 'input window, operand 1']
    #allocation6 [shape = 's32[2]{0}', space=sflag, size = 0x8, scoped, tag = 'scoped memory for tpu_custom_call.1']
    #allocation7 [shape = 'u8[4096]{0}', space=vmem, size = 0x1000, scoped, tag = 'output window, operand 0']
    %7 = vsyncpa [#allocation3], 0
    %8 = vsyncpa [#allocation6], 0
    %s9 = scalar_lea.sflag [#allocation6], 1
    %10 = vsyncpa %s9, 0
    %11 = vsyncpa [#allocation4], 0
    %s12 = scalar_lea.sflag [#allocation4], 1
    %13 = vsyncpa %s12, 0
    loop: start=0, step=1, limit=6
    $region2: #{tpu_custom_call.1} parent=1 // loop_pre_header
      _
    $region3: #{tpu_custom_call.1} parent=1 // loop_header
      %s15 = sphi 0, %s19
      %p16 = scmp.ge.s32.totalorder %s15, 6
      %s23 = sphi 0, %s23
      %s25 = sphi 0, %s23
      %s26 = sphi 0, %s25
      %s40 = sphi 0, %s26
      %s46 = sphi 0, %s48
      %s49 = sphi 0, %s46
      %s50 = sphi 0, %s49
      %s66 = sphi 0, %s50
      %s72 = sphi 0, %s74
      %s75 = sphi 0, %s72
      %s76 = sphi 0, %s75
      %s92 = sphi 0, %s76
    $region4: #{tpu_custom_call.1} parent=1 // loop_header_branch
      %18 = sbr.rel (%p16) target = $region8
    $region5: #{tpu_custom_call.1} parent=1 // loop_body
      %s20 = ssub.s32 %s15, 1
      %s21 = ssub.s32 %s15, 2
      %s22 = sadd.s32 %s15, 1
      %s24 = sadd.s32 %s23, 1
      %p27 = scmp.eq.s32.totalorder %s15, 3
      %p28 = scmp.ne.s32.totalorder %s23, %s25
      %p29 = scmp.eq.s32.totalorder %s15, 0
      %p30 = por %p28, %p29
      %p31 = scmp.ne.s32.totalorder %s23, %s25
      %p32 = scmp.eq.s32.totalorder %s20, 3
      %p33 = por %p31, %p32
      %p34 = scmp.ne.s32.totalorder %s25, %s26
      %p35 = scmp.eq.s32.totalorder %s20, 0
      %p36 = por %p34, %p35
      %p37 = scmp.ne.s32.totalorder %s25, %s26
      %p38 = scmp.eq.s32.totalorder %s21, 3
      %p39 = por %p37, %p38
      %p41 = scmp.ne.s32.totalorder %s26, %s40
      %p42 = scmp.eq.s32.totalorder %s21, 0
      %p43 = por %p41, %p42
      %s44 = ssub.s32 %s15, %s22
      %p45 = scmp.eq.s32.totalorder %s44, 0
      %s47 = sadd.s32 %s46, 1
      %s48 = scalar_select %p45, %s46, %s47
      %p51 = pneg %p45
      %p52 = scmp.eq.s32.totalorder %s15, 3
      %p53 = por %p51, %p52
      %p54 = scmp.ne.s32.totalorder %s46, %s49
      %p55 = scmp.eq.s32.totalorder %s15, 0
      %p56 = por %p54, %p55
      %p57 = scmp.ne.s32.totalorder %s46, %s49
      %p58 = scmp.eq.s32.totalorder %s20, 3
      %p59 = por %p57, %p58
      %p60 = scmp.ne.s32.totalorder %s49, %s50
      %p61 = scmp.eq.s32.totalorder %s20, 0
      %p62 = por %p60, %p61
      %p63 = scmp.ne.s32.totalorder %s49, %s50
      %p64 = scmp.eq.s32.totalorder %s21, 3
      %p65 = por %p63, %p64
      %p67 = scmp.ne.s32.totalorder %s50, %s66
      %p68 = scmp.eq.s32.totalorder %s21, 0
      %p69 = por %p67, %p68
      %s70 = ssub.s32 %s15, %s22
      %p71 = scmp.eq.s32.totalorder %s70, 0
      %s73 = sadd.s32 %s72, 1
      %s74 = scalar_select %p71, %s72, %s73
      %p77 = pneg %p71
      %p78 = scmp.eq.s32.totalorder %s15, 3
      %p79 = por %p77, %p78
      %p80 = scmp.ne.s32.totalorder %s72, %s75
      %p81 = scmp.eq.s32.totalorder %s15, 0
      %p82 = por %p80, %p81
      %p83 = scmp.ne.s32.totalorder %s72, %s75
      %p84 = scmp.eq.s32.totalorder %s20, 3
      %p85 = por %p83, %p84
      %p86 = scmp.ne.s32.totalorder %s75, %s76
      %p87 = scmp.eq.s32.totalorder %s20, 0
      %p88 = por %p86, %p87
      %p89 = scmp.ne.s32.totalorder %s75, %s76
      %p90 = scmp.eq.s32.totalorder %s21, 3
      %p91 = por %p89, %p90
      %p93 = scmp.ne.s32.totalorder %s76, %s92
      %p94 = scmp.eq.s32.totalorder %s21, 0
      %p95 = por %p93, %p94
      %p96 = scmp.le.s32.totalorder 1, %s15
      %p97 = scmp.lt.s32.totalorder %s15, 5
      %p98 = pnand %p96, %p97
      %p99 = pneg %p98
      // Predicated region
      $region9: #{tpu_custom_call.1} parent=5 // pred_check
        _
      $region10: #{tpu_custom_call.1} parent=5 // pred_check_branch
        %101 = sbr.rel (%p98) target = $region12
      $region11: #{tpu_custom_call.1} parent=5 // pred_region
        %s102 = ssub.s32 %s15, 1
        // Predicated region
        $region13: #{tpu_custom_call.1} parent=11 // pred_check
          %p103 = pneg %p36
        $region14: #{tpu_custom_call.1} parent=11 // pred_check_branch
          %105 = sbr.rel (%p103) target = $region16
        $region15: #{tpu_custom_call.1} parent=11 // pred_region
          %s107 = ssub.s32 16, 16
          %108 = vsyncadd [#allocation3], %s107
          %s110 = sshll.u32 [#allocation2], 4
          %s111 = int_to_ptr.vmem [resolvable:$true] %s110
          %113 = dma.hbm_to_vmem [thread:$0]  %s0, 16, %s111, [#allocation3]
        $region16: #{tpu_custom_call.1} parent=11 // pred_fallthru
          _
      $region12: #{tpu_custom_call.1} parent=5 // pred_fallthru
        _
      %p114 = scmp.lt.s32.totalorder %s15, 4
      // Predicated region
      $region17: #{tpu_custom_call.1} parent=5 // pred_check
        %p115 = pneg %p114
      $region18: #{tpu_custom_call.1} parent=5 // pred_check_branch
        %117 = sbr.rel (%p115) target = $region20
      $region19: #{tpu_custom_call.1} parent=5 // pred_region
        // Predicated region
        $region21: #{tpu_custom_call.1} parent=19 // pred_check
          %p118 = pneg %p56
        $region22: #{tpu_custom_call.1} parent=19 // pred_check_branch
          %120 = sbr.rel (%p118) target = $region24
        $region23: #{tpu_custom_call.1} parent=19 // pred_region
          %s121 = sand.u32 %s46, 1
          %s122 = scalar_lea.sflag [#allocation6], %s121
          %s123 = sand.u32 %s46, 1
          %s124 = smul.addr %s123, 32
          %s125 = scalar_lea.vmem [#allocation5], %s124
          %s126 = smul.u32 2, %s15
          %s128 = ssub.s32 512, 512
          %129 = vsyncadd %s122, %s128
          %s130 = smul.addr %s126, 64
          %s131 = scalar_lea.hbm %s1, %s130
          %s132 = sshll.u32 %s125, 4
          %s133 = int_to_ptr.vmem [resolvable:$true] %s132
          %138 = dma.hbm_to_vmem [thread:$0]  %s131, 512, %s133, %s122, 512, 128, 8
        $region24: #{tpu_custom_call.1} parent=19 // pred_fallthru
          _
      $region20: #{tpu_custom_call.1} parent=5 // pred_fallthru
        _
      %p139 = scmp.le.s32.totalorder 1, %s15
      %p140 = scmp.lt.s32.totalorder %s15, 5
      %p141 = pnand %p139, %p140
      %p142 = pneg %p141
      // Predicated region
      $region25: #{tpu_custom_call.1} parent=5 // pred_check
        _
      $region26: #{tpu_custom_call.1} parent=5 // pred_check_branch
        %144 = sbr.rel (%p141) target = $region28
      $region27: #{tpu_custom_call.1} parent=5 // pred_region
        %s145 = ssub.s32 %s15, 1
        // Predicated region
        $region29: #{tpu_custom_call.1} parent=27 // pred_check
          %p146 = pneg %p36
        $region30: #{tpu_custom_call.1} parent=27 // pred_check_branch
          %148 = sbr.rel (%p146) target = $region32
        $region31: #{tpu_custom_call.1} parent=27 // pred_region
          %149 = dma.done [#allocation3], 16
        $region32: #{tpu_custom_call.1} parent=27 // pred_fallthru
          _
        %s150 = sand.u32 %s49, 1
        %s151 = scalar_lea.sflag [#allocation6], %s150
        %s152 = sand.u32 %s49, 1
        %s153 = smul.addr %s152, 32
        %s154 = scalar_lea.vmem [#allocation5], %s153
        // Predicated region
        $region33: #{tpu_custom_call.1} parent=27 // pred_check
          %p155 = pneg %p62
        $region34: #{tpu_custom_call.1} parent=27 // pred_check_branch
          %157 = sbr.rel (%p155) target = $region36
        $region35: #{tpu_custom_call.1} parent=27 // pred_region
          %158 = dma.done %s151, 512
        $region36: #{tpu_custom_call.1} parent=27 // pred_fallthru
          _
        %p159 = pneg %p36
        %p160 = pneg %p33
        %s161 = sand.u32 %s49, 1
        %s162 = scalar_lea.sflag [#allocation6], %s161
        %s163 = sand.u32 %s49, 1
        %s164 = smul.addr %s163, 32
        %s165 = scalar_lea.vmem [#allocation5], %s164
        %p166 = pneg %p62
        %p167 = pneg %p59
        %p168 = pneg %p88
        %p169 = pneg %p85
        %s170 = sand.u32 %s75, 1
        %s171 = scalar_lea.sflag [#allocation4], %s170
        %s172 = sand.u32 %s75, 1
        %s173 = smul.addr %s172, 4
        %s174 = scalar_lea.vmem [#allocation7], %s173
        %s175 = smul.u32 2, %s20
        %s176 = smul.u32 2, %s20
        %v178 = vld [vmem:[#allocation2] sm:$0x1]
        %v179 = vld [vmem:[%s154] sm:$0xff]
        %v180 = vld [vmem:[%s154 + $0x8] sm:$0xff]
        %v181 = vld [vmem:[%s154 + $0x10] sm:$0xff]
        %v182 = vld [vmem:[%s154 + $0x18] sm:$0xff]
        %v187 = vunpack.c.l.b16 %v179
        %v188 = vunpack.c.h.b16 %v179
        %v189 = vunpack.c.l.b16 %v180
        %v190 = vunpack.c.h.b16 %v180
        %v191 = vunpack.c.l.b16 %v181
        %v192 = vunpack.c.h.b16 %v181
        %v193 = vunpack.c.l.b16 %v182
        %v194 = vunpack.c.h.b16 %v182
        %v195 = vpack.c.b16 %v189, %v187
        %v196 = vpack.c.b16 %v190, %v188
        %v197 = vpack.c.b16 %v193, %v191
        %v198 = vpack.c.b16 %v194, %v192
        %vm203 = vcmask 261120
        %v205 = vsel %vm203, %v178, 0
        %207 = vmatprep.subr.bf16.mxu0 %v196
        %208 = vmatpush1.bf16.msra.mxu0 %v195
        %209 = vmatprep.subr.bf16.mxu0 %v198
        %210 = vmatpush1.bf16.msra.mxu0 %v197
        %211 = vmatprep.subr.bf16.mxu0 0
        %212 = vmatpush1.bf16.msra.mxu0 0
        %213 = vmatprep.subr.bf16.mxu0 0
        %214 = vmatpush1.bf16.msra.mxu0 0
        %215 = vmatprep.subr.bf16.mxu0 0
        %216 = vmatpush1.bf16.msra.mxu0 0
        %217 = vmatprep.subr.bf16.mxu0 0
        %218 = vmatpush1.bf16.msra.mxu0 0
        %219 = vmatprep.subr.bf16.mxu0 0
        %220 = vmatpush1.bf16.msra.mxu0 0
        %221 = vmatprep.subr.bf16.mxu0 0
        %222 = vmatpush1.bf16.msra.mxu0 0
        %223 = vmatprep.subr.bf16.mxu0 0
        %224 = vmatpush1.bf16.msra.mxu0 0
        %225 = vmatprep.subr.bf16.mxu0 0
        %226 = vmatpush1.bf16.msra.mxu0 0
        %227 = vmatprep.subr.bf16.mxu0 0
        %228 = vmatpush1.bf16.msra.mxu0 0
        %229 = vmatprep.subr.bf16.mxu0 0
        %230 = vmatpush1.bf16.msra.mxu0 0
        %231 = vmatprep.subr.bf16.mxu0 0
        %232 = vmatpush1.bf16.msra.mxu0 0
        %233 = vmatprep.subr.bf16.mxu0 0
        %234 = vmatpush1.bf16.msra.mxu0 0
        %235 = vmatprep.subr.bf16.mxu0 0
        %236 = vmatpush1.bf16.msra.mxu0 0
        %237 = vmatprep.subr.bf16.mxu0 0
        %238 = vmatpush1.bf16.msra.mxu0 0
        %239 = vmatprep.mubr.bf16.mxu0 0
        %240 = vmatmul.mubr.bf16.gmra.mrb[0].mxu0 %v205
        %v241 = vpop.f32.mrb[0].mxu0
        %v242 = vadd.f32 0.0, %v241
        %v243 = vpop.f32.mrb[0].mxu0
        %v244 = vadd.f32 0.0, %v243
        %v245 = vpop.f32.mrb[0].mxu0
        %v246 = vpop.f32.mrb[0].mxu0
        %247 = vdwg.mxu0
        %v248 = vsub.f32 0.0, %v242
        %v249 = vsub.f32 0.0, %v244
        %v250 = vmul.f32 %v248, 1.442695
        %v251 = vpow.pop %v250
        %v252 = vmul.f32 %v249, 1.442695
        %v253 = vpow.pop %v252
        %v254 = vadd.f32 %v251, 1.0
        %v255 = vadd.f32 %v253, 1.0
        %v256 = vrcp.pop %v254
        %v257 = vmul.f32 1.0, %v256
        %v258 = vrcp.pop %v255
        %v259 = vmul.f32 1.0, %v258
        %v262 = vcombine.low %v257, %v259
        %v264 = vunpack.c.l.s4 1983009808
        %v265 = vunpack.c.0.s8 %v264
        %v266 = vlaneseq
        %v267 = vshrl.u32 %v266, 7
        %v268 = vsub.s32 %v265, %v267
        %v269 = vrot.slane %v262, %v268
        %271 = vst [vmem:[%s174] sm:$0xf] %v269
        %s272 = sand.u32 %s75, 1
        %s273 = scalar_lea.sflag [#allocation4], %s272
        %s274 = sand.u32 %s75, 1
        %s275 = smul.addr %s274, 4
        %s276 = scalar_lea.vmem [#allocation7], %s275
        // Predicated region
        $region37: #{tpu_custom_call.1} parent=27 // pred_check
          %p277 = pneg %p85
        $region38: #{tpu_custom_call.1} parent=27 // pred_check_branch
          %279 = sbr.rel (%p277) target = $region40
        $region39: #{tpu_custom_call.1} parent=27 // pred_region
          %s280 = smul.u32 2, %s20
          %s282 = ssub.s32 64, 64
          %283 = vsyncadd %s273, %s282
          %s284 = smul.addr %s280, 32
          %s285 = scalar_lea.hbm %s2, %s284
          %s287 = sshll.u32 %s276, 4
          %s288 = int_to_ptr.vmem [resolvable:$true] %s287
          %290 = dma.vmem_to_hbm [thread:$0]  %s288, 64, %s285, %s273
        $region40: #{tpu_custom_call.1} parent=27 // pred_fallthru
          _
      $region28: #{tpu_custom_call.1} parent=5 // pred_fallthru
        _
      %p291 = scmp.le.s32.totalorder 2, %s15
      // Predicated region
      $region41: #{tpu_custom_call.1} parent=5 // pred_check
        %p292 = pneg %p291
      $region42: #{tpu_custom_call.1} parent=5 // pred_check_branch
        %294 = sbr.rel (%p292) target = $region44
      $region43: #{tpu_custom_call.1} parent=5 // pred_region
        %s295 = ssub.s32 %s15, 2
        // Predicated region
        $region45: #{tpu_custom_call.1} parent=43 // pred_check
          %p296 = pneg %p91
        $region46: #{tpu_custom_call.1} parent=43 // pred_check_branch
          %298 = sbr.rel (%p296) target = $region48
        $region47: #{tpu_custom_call.1} parent=43 // pred_region
          %s299 = sand.u32 %s76, 1
          %s300 = scalar_lea.sflag [#allocation4], %s299
          %s301 = sand.u32 %s76, 1
          %s302 = smul.addr %s301, 4
          %s303 = scalar_lea.vmem [#allocation7], %s302
          %304 = dma.done %s300, 64
        $region48: #{tpu_custom_call.1} parent=43 // pred_fallthru
          _
      $region44: #{tpu_custom_call.1} parent=5 // pred_fallthru
        _
    $region6: #{tpu_custom_call.1} parent=1 // loop_footer
      %s19 = sadd.s32 1, %s15
    $region7: #{tpu_custom_call.1} parent=1 // loop_footer_branch
      %14 = sbr.rel target = $region3
    $region8: #{tpu_custom_call.1} parent=1 // loop_exit
      _
    %305 = vsyncpa [#allocation3], 1
    %s306 = scalar_lea.sflag [#allocation3], 1
    %307 = vsyncpa %s306, 1
    %308 = vsyncpa [#allocation6], 1
    %s309 = scalar_lea.sflag [#allocation6], 1
    %310 = vsyncpa %s309, 1
    %311 = vsyncpa [#allocation4], 1
    %s312 = scalar_lea.sflag [#allocation4], 1
    %313 = vsyncpa %s312, 1

</llo_original>
